<compile_context>
chip_gen: v7x
topology: tpu7x:2x2x1
jax: 0.10.0
libtpu: 0.0.40
codegen_flags: <defaults>
</compile_context>

<pallas_src>
import functools

import jax
import jax.numpy as jnp
from jax.experimental import pallas as pl
from jax.experimental.pallas import tpu as pltpu


def swem_hier_kernel(x_ref, w_ref, b_ref, o_ref, *, n, num_windows):
    """x_ref: [Bt, L, D] (bf16/f32), w_ref: [1, D] f32 fc weight pre-scaled by 1/n,
    b_ref: [1, 1] f32 bias (SMEM), o_ref: [Bt, 1] f32."""
    # Hierarchical pooling on the VPU: per-window sums (f32 accumulation, exact
    # avg_pool1d floor behaviour — remainder tokens never touched) + running max.
    running = None
    for w in range(num_windows):
        win = x_ref[:, pl.ds(w * n, n), :].astype(jnp.float32)    # [Bt, n, D]
        s = jnp.sum(win, axis=1)                                  # [Bt, D]
        running = s if running is None else jnp.maximum(running, s)
    # fc: weight already carries the 1/n scale; VPU multiply + lane reduce + SMEM bias.
    out = jnp.sum(running * w_ref[...], axis=-1, keepdims=True) + b_ref[0, 0]
    # TODO(synk): nn.Dropout — identity in eval mode; not applied here.
    o_ref[...] = out.astype(o_ref.dtype)


def _vmem_capacity_bytes():
    """Per-core VMEM capacity; conservative fallback if the query is unavailable."""
    try:
        return int(pltpu.get_tpu_info().vmem_capacity_bytes)
    except Exception:
        return 64 * 1024 * 1024          # v7x per-TC size; safe lower bound everywhere


def _round_up(x, m):
    return ((x + m - 1) // m) * m


def _pick_b_tile(B, L, D, itemsize, n, vmem_budget_bytes):
    """Largest batch tile whose double-buffered input block plus the in-kernel f32
    intermediates fit the budget, capped so the grid keeps >=4 steps when B allows."""
    # per batch row: 2x (double-buffered) input block + f32 window slice + window sum
    # + running max + output, with a little slack for compiler temporaries.
    per_row = 2 * L * D * itemsize + (n + 2) * D * 4 + 32
    bt = int(vmem_budget_bytes // max(per_row, 1))
    bt = max(1, min(bt, B, 1024))
    # Keep >= 4 grid steps (>= 2 per v7x TensorCore) whenever the batch is large
    # enough, so "parallel" sharding and the input double-buffer actually overlap.
    if B >= 32:
        bt = min(bt, _round_up(pl.cdiv(B, 4), 8))
    # Partial-batch tiles must keep the output block's sublane dim 8-aligned.
    if bt < B:
        bt = max(8, (bt // 8) * 8)
        bt = min(bt, B)
    return bt


def swem_hier_forward(text, emb_table, fc_w, fc_b, n):
    """text: [L, B] int token ids (torchtext layout). emb_table should already be in
    the dtype the kernel consumes (e.g. a persistent bf16 copy, cast once outside the
    per-call path). Returns [B, 1] float32."""
    L, B = text.shape
    D = emb_table.shape[1]
    W = L // n
    assert W >= 1, "seq_len must be >= kernel_size"

    # Embedding gather directly in [B, L, D] order (plain-JAX glue; table already bf16).
    # TODO(synk): for large D, fuse this gather into the kernel (token ids via scalar
    # prefetch + manual double-buffered DMA row gather from emb_table in pl.ANY) to cut
    # the extra HBM round trip of the gathered activations.
    x = jnp.take(emb_table, text.T, axis=0)                        # [B, L, D]

    # Fold avg_pool1d's 1/n into the fc weight (positive scale commutes with the max).
    w = (fc_w.reshape(1, D) * (1.0 / n)).astype(jnp.float32)
    b = fc_b.reshape(1, 1).astype(jnp.float32)

    vmem_cap = _vmem_capacity_bytes()
    vmem_budget = int(vmem_cap * 0.55)                              # ~20%+ headroom
    vmem_limit = max(32 * 1024 * 1024,
                     min(int(vmem_cap * 0.75), 112 * 1024 * 1024))

    b_tile = _pick_b_tile(B, L, D, jnp.dtype(x.dtype).itemsize, n, vmem_budget)
    grid = (pl.cdiv(B, b_tile),)

    kern = functools.partial(swem_hier_kernel, n=n, num_windows=W)
    out = pl.pallas_call(
        kern,
        out_shape=jax.ShapeDtypeStruct((B, 1), jnp.float32),
        grid=grid,
        in_specs=[
            pl.BlockSpec((b_tile, L, D), lambda i: (i, 0, 0)),      # batch-tiled input
            pl.BlockSpec((1, D), lambda i: (0, 0)),                 # resident fc weight
            pl.BlockSpec(memory_space=pltpu.MemorySpace.SMEM),      # bias on scalar path
        ],
        out_specs=pl.BlockSpec((b_tile, 1), lambda i: (i, 0)),
        compiler_params=pltpu.CompilerParams(
            dimension_semantics=("parallel",),
            vmem_limit_bytes=vmem_limit,
        ),
    )(x, w, b)
    return out


if __name__ == "__main__":
    # Small deterministic config consistent with the module's forward.
    vocab_size = 50
    embedding_dim = 32
    pad_idx = 0
    n = 5            # kernel_size
    seq_len = 23     # NOT a multiple of n: exercises avg_pool1d's floor behaviour
    batch = 4

    key = jax.random.PRNGKey(0)
    k_emb, k_w, k_b, k_txt = jax.random.split(key, 4)

    emb_table = jax.random.normal(k_emb, (vocab_size, embedding_dim), jnp.float32)
    emb_table = emb_table.at[pad_idx].set(0.0)                 # nn.Embedding padding_idx
    fc_w = 0.1 * jax.random.normal(k_w, (1, embedding_dim), jnp.float32)   # Linear.weight
    fc_b = 0.01 * jax.random.normal(k_b, (1,), jnp.float32)                # Linear.bias

    # Persistent bf16 copy of the embedding table (cast once, outside the per-call path).
    emb_table_bf16 = emb_table.astype(jnp.bfloat16)

    text = jax.random.randint(k_txt, (seq_len, batch), 0, vocab_size, jnp.int32)
    text_len = jnp.full((batch,), seq_len, jnp.int32)          # unused, kept for parity

    out = swem_hier_forward(text, emb_table_bf16, fc_w, fc_b, n)
    out = jax.block_until_ready(out)

    # Pure-JAX reference mirroring the PyTorch forward with the same bf16 embedding
    # values the kernel consumes (f32 math): avg_pool1d(n) -> max over windows -> fc
    # (dropout = identity in eval).
    W = seq_len // n
    x_ref = jnp.take(emb_table_bf16, text.T, axis=0).astype(jnp.float32)
    xw = x_ref[:, : W * n, :].reshape(batch, W, n, embedding_dim)
    pooled = xw.mean(axis=2).max(axis=1)                        # [B, D]
    ref = pooled @ fc_w.T + fc_b                                # [B, 1]

    assert out.shape == (batch, 1)
    assert jnp.allclose(out, ref, atol=1e-3, rtol=1e-3), (out, ref)
    print("KERNEL_OK")
</pallas_src>

<mosaic_0001>
module attributes {stable_mosaic.version = 11 : i64} {
  func.func @swem_hier_kernel(%arg0: i32, %arg1: memref<4x23x32xbf16, #tpu.memory_space<vmem>>, %arg2: memref<1x32xf32, #tpu.memory_space<vmem>>, %arg3: memref<1x1xf32, #tpu.memory_space<smem>>, %arg4: memref<4x1xf32, #tpu.memory_space<vmem>>) attributes {dimension_semantics = [#tpu.dimension_semantics<parallel>], iteration_bounds = array<i64: 1>, scalar_prefetch = 0 : i64, scratch_operands = 0 : i64, tpu.core_type = #tpu.core_type<tc>, window_params = [{transform_indices = @transform_0, window_bounds = array<i64: 4, 23, 32>}, {pipeline_mode = #tpu.pipeline_mode<synchronous>, transform_indices = @transform_1, window_bounds = array<i64: 1, 32>}, {transform_indices = @transform_2, window_bounds = array<i64: 1, 1>}, {transform_indices = @transform_3, window_bounds = array<i64: 4, 1>}]} {
    %c0 = arith.constant 0 : index
    %c0_0 = arith.constant 0 : index
    %c0_1 = arith.constant 0 : index
    %0 = vector.load %arg1[%c0, %c0_0, %c0_1] : memref<4x23x32xbf16, #tpu.memory_space<vmem>>, vector<4x5x32xbf16>
    %1 = arith.extf %0 : vector<4x5x32xbf16> to vector<4x5x32xf32>
    %cst = arith.constant dense<0.000000e+00> : vector<4x32xf32>
    %2 = vector.multi_reduction <add>, %1, %cst [1] : vector<4x5x32xf32> to vector<4x32xf32>
    %c0_2 = arith.constant 0 : index
    %c5 = arith.constant 5 : index
    %c0_3 = arith.constant 0 : index
    %3 = vector.load %arg1[%c0_2, %c5, %c0_3] : memref<4x23x32xbf16, #tpu.memory_space<vmem>>, vector<4x5x32xbf16>
    %4 = arith.extf %3 : vector<4x5x32xbf16> to vector<4x5x32xf32>
    %cst_4 = arith.constant dense<0.000000e+00> : vector<4x32xf32>
    %5 = vector.multi_reduction <add>, %4, %cst_4 [1] : vector<4x5x32xf32> to vector<4x32xf32>
    %6 = arith.maximumf %2, %5 : vector<4x32xf32>
    %c0_5 = arith.constant 0 : index
    %c10 = arith.constant 10 : index
    %c0_6 = arith.constant 0 : index
    %7 = vector.load %arg1[%c0_5, %c10, %c0_6] : memref<4x23x32xbf16, #tpu.memory_space<vmem>>, vector<4x5x32xbf16>
    %8 = arith.extf %7 : vector<4x5x32xbf16> to vector<4x5x32xf32>
    %cst_7 = arith.constant dense<0.000000e+00> : vector<4x32xf32>
    %9 = vector.multi_reduction <add>, %8, %cst_7 [1] : vector<4x5x32xf32> to vector<4x32xf32>
    %10 = arith.maximumf %6, %9 : vector<4x32xf32>
    %c0_8 = arith.constant 0 : index
    %c15 = arith.constant 15 : index
    %c0_9 = arith.constant 0 : index
    %11 = vector.load %arg1[%c0_8, %c15, %c0_9] : memref<4x23x32xbf16, #tpu.memory_space<vmem>>, vector<4x5x32xbf16>
    %12 = arith.extf %11 : vector<4x5x32xbf16> to vector<4x5x32xf32>
    %cst_10 = arith.constant dense<0.000000e+00> : vector<4x32xf32>
    %13 = vector.multi_reduction <add>, %12, %cst_10 [1] : vector<4x5x32xf32> to vector<4x32xf32>
    %14 = arith.maximumf %10, %13 : vector<4x32xf32>
    %c0_11 = arith.constant 0 : index
    %c0_12 = arith.constant 0 : index
    %15 = vector.load %arg2[%c0_11, %c0_12] : memref<1x32xf32, #tpu.memory_space<vmem>>, vector<1x32xf32>
    %16 = vector.broadcast %15 : vector<1x32xf32> to vector<4x32xf32>
    %17 = arith.mulf %14, %16 : vector<4x32xf32>
    %cst_13 = arith.constant dense<0.000000e+00> : vector<4xf32>
    %18 = vector.multi_reduction <add>, %17, %cst_13 [1] : vector<4x32xf32> to vector<4xf32>
    %19 = vector.shape_cast %18 : vector<4xf32> to vector<4x1xf32>
    %c0_14 = arith.constant 0 : index
    %c0_15 = arith.constant 0 : index
    %20 = memref.load %arg3[%c0_14, %c0_15] : memref<1x1xf32, #tpu.memory_space<smem>>
    %21 = vector.broadcast %20 : f32 to vector<4x1xf32>
    %22 = arith.addf %19, %21 : vector<4x1xf32>
    %c0_16 = arith.constant 0 : index
    %c0_17 = arith.constant 0 : index
    %23 = vector.load %arg4[%c0_16, %c0_17] : memref<4x1xf32, #tpu.memory_space<vmem>>, vector<4x1xf32>
    tpu.vector_store %arg4[%c0_16, %c0_17], %22 {strides = array<i32>} : memref<4x1xf32, #tpu.memory_space<vmem>>, vector<4x1xf32>,
    return
  }
  func.func @transform_0(%arg0: i32) -> (i32, i32, i32) {
    %c0_i32 = arith.constant 0 : i32
    %c0_i32_0 = arith.constant 0 : i32
    %c0_i32_1 = arith.constant 0 : i32
    return %arg0, %c0_i32, %c0_i32_0 : i32, i32, i32
  }
  func.func @transform_1(%arg0: i32) -> (i32, i32) {
    %c0_i32 = arith.constant 0 : i32
    %c0_i32_0 = arith.constant 0 : i32
    %c0_i32_1 = arith.constant 0 : i32
    return %c0_i32, %c0_i32_0 : i32, i32
  }
  func.func @transform_2(%arg0: i32) -> (i32, i32) {
    %c0_i32 = arith.constant 0 : i32
    %c0_i32_0 = arith.constant 0 : i32
    %c0_i32_1 = arith.constant 0 : i32
    return %c0_i32, %c0_i32_0 : i32, i32
  }
  func.func @transform_3(%arg0: i32) -> (i32, i32) {
    %c0_i32 = arith.constant 0 : i32
    %c0_i32_0 = arith.constant 0 : i32
    return %arg0, %c0_i32 : i32, i32
  }
}

</mosaic_0001>

<llo_original>
// kernel: tpu_custom_call.1
$region0: #{tpu_custom_call.1}
  #allocation0 [shape = 'u32[]', space=smem, size = 0x4, offset = 0x4, fixed_abs, tag = 'smem constant byte address 0x4 - core index']
  #allocation1 [shape = 'u32[144,128]{1,0:T(1,128)}', space=vmem, size = 0x12000, scoped, tag = 'internal scratch']
  #allocation2 [shape = 'f32[1,1]{1,0:T(1,128)S(6)}', space=smem, size = 0x200, scoped, tag = 'scoped memory for tpu_custom_call.1']
  %s0 = inlined_call_operand.vmem [shape: bf16[4,23,32], index: 0, kind: input, shape index: {}]
  %s1 = inlined_call_operand.vmem [shape: f32[1,32], index: 1, kind: input, shape index: {}]
  %s2 = inlined_call_operand.<no memory space> [shape: f32[1,1], index: 2, kind: input, shape index: {}]
  %s3 = inlined_call_operand.vmem [shape: f32[4,1], index: 3, kind: output, shape index: {}]
  %s4 = sld [smem:[#allocation0]]
  $region22: #{tpu_custom_call.1} parent=0
    _
  %s6 = ssub.s32 1, %s4
  %s7 = scalar_select 0, %s6, %s4
  %8 = sst [smem:[#allocation2]] %s2
  // Predicated region
  $region2: #{tpu_custom_call.1} parent=0 // pred_check
    _
  $region3: #{tpu_custom_call.1} parent=0 // pred_check_branch
    %10 = sbr.rel (0) target = $region5
  $region4: #{tpu_custom_call.1} parent=0 // pred_region
    _
  $region5: #{tpu_custom_call.1} parent=0 // pred_fallthru
    _
  // Predicated region
  $region6: #{tpu_custom_call.1} parent=0 // pred_check
    _
  $region7: #{tpu_custom_call.1} parent=0 // pred_check_branch
    %12 = sbr.rel (0) target = $region9
  $region8: #{tpu_custom_call.1} parent=0 // pred_region
    _
  $region9: #{tpu_custom_call.1} parent=0 // pred_fallthru
    _
  // Predicated region
  $region10: #{tpu_custom_call.1} parent=0 // pred_check
    _
  $region11: #{tpu_custom_call.1} parent=0 // pred_check_branch
    %14 = sbr.rel (0) target = $region13
  $region12: #{tpu_custom_call.1} parent=0 // pred_region
    _
  $region13: #{tpu_custom_call.1} parent=0 // pred_fallthru
    _
  %v15 = vld [vmem:[%s0] sm:$0x7]
  %v16 = vld [vmem:[%s0 + $0xc] sm:$0x7]
  %v17 = vld [vmem:[%s0 + $0x18] sm:$0x7]
  %v18 = vld [vmem:[%s0 + $0x24] sm:$0x7]
  %v19 = vunpack.c.l.bf16 %v15
  %v20 = vunpack.c.l.bf16 %v16
  %v21 = vunpack.c.l.bf16 %v17
  %v22 = vunpack.c.l.bf16 %v18
  %vm23 = vcmask 258048
  %v24 = vsel %vm23, %v19, 0.0
  %v25 = vrot.slane %v24, 4
  %v26 = vadd.f32 %v24, %v25
  %v27 = vrot.slane %v26, 2
  %v28 = vadd.f32 %v26, %v27
  %v29 = vrot.slane %v28, 1
  %v30 = vadd.f32 %v28, %v29
  %v31 = vsel %vm23, %v20, 0.0
  %v32 = vrot.slane %v31, 4
  %v33 = vadd.f32 %v31, %v32
  %v34 = vrot.slane %v33, 2
  %v35 = vadd.f32 %v33, %v34
  %v36 = vrot.slane %v35, 1
  %v37 = vadd.f32 %v35, %v36
  %v38 = vsel %vm23, %v21, 0.0
  %v39 = vrot.slane %v38, 4
  %v40 = vadd.f32 %v38, %v39
  %v41 = vrot.slane %v40, 2
  %v42 = vadd.f32 %v40, %v41
  %v43 = vrot.slane %v42, 1
  %v44 = vadd.f32 %v42, %v43
  %v45 = vsel %vm23, %v22, 0.0
  %v46 = vrot.slane %v45, 4
  %v47 = vadd.f32 %v45, %v46
  %v48 = vrot.slane %v47, 2
  %v49 = vadd.f32 %v47, %v48
  %v50 = vrot.slane %v49, 1
  %v51 = vadd.f32 %v49, %v50
  %v52 = vld [vmem:[%s0] sm:$0xc]
  %v53 = vld [vmem:[%s0 + $0x4] sm:$0x1]
  %v54 = vld [vmem:[%s0 + $0xc] sm:$0xc]
  %v55 = vld [vmem:[%s0 + $0x10] sm:$0x1]
  %v56 = vld [vmem:[%s0 + $0x18] sm:$0xc]
  %v57 = vld [vmem:[%s0 + $0x1c] sm:$0x1]
  %v58 = vld [vmem:[%s0 + $0x24] sm:$0xc]
  %v59 = vld [vmem:[%s0 + $0x28] sm:$0x1]
  %v60 = vunpack.c.l.bf16 %v52
  %v61 = vunpack.c.l.bf16 %v53
  %v62 = vunpack.c.l.bf16 %v54
  %v63 = vunpack.c.l.bf16 %v55
  %v64 = vunpack.c.l.bf16 %v56
  %v65 = vunpack.c.l.bf16 %v57
  %v66 = vunpack.c.l.bf16 %v58
  %v67 = vunpack.c.l.bf16 %v59
  %vm76 = vcmask 1042432
  %v77 = vrot.slane %v60, 5
  %v78 = vrot.slane %v61, 5
  %v79 = vsel %vm76, %v77, %v78
  %v80 = vrot.slane %v62, 5
  %v81 = vrot.slane %v63, 5
  %v82 = vsel %vm76, %v80, %v81
  %v83 = vrot.slane %v64, 5
  %v84 = vrot.slane %v65, 5
  %v85 = vsel %vm76, %v83, %v84
  %v86 = vrot.slane %v66, 5
  %v87 = vrot.slane %v67, 5
  %v88 = vsel %vm76, %v86, %v87
  %v93 = vsel %vm23, %v79, 0.0
  %v94 = vrot.slane %v93, 4
  %v95 = vadd.f32 %v93, %v94
  %v96 = vrot.slane %v95, 2
  %v97 = vadd.f32 %v95, %v96
  %v98 = vrot.slane %v97, 1
  %v99 = vadd.f32 %v97, %v98
  %v100 = vsel %vm23, %v82, 0.0
  %v101 = vrot.slane %v100, 4
  %v102 = vadd.f32 %v100, %v101
  %v103 = vrot.slane %v102, 2
  %v104 = vadd.f32 %v102, %v103
  %v105 = vrot.slane %v104, 1
  %v106 = vadd.f32 %v104, %v105
  %v107 = vsel %vm23, %v85, 0.0
  %v108 = vrot.slane %v107, 4
  %v109 = vadd.f32 %v107, %v108
  %v110 = vrot.slane %v109, 2
  %v111 = vadd.f32 %v109, %v110
  %v112 = vrot.slane %v111, 1
  %v113 = vadd.f32 %v111, %v112
  %v114 = vsel %vm23, %v88, 0.0
  %v115 = vrot.slane %v114, 4
  %v116 = vadd.f32 %v114, %v115
  %v117 = vrot.slane %v116, 2
  %v118 = vadd.f32 %v116, %v117
  %v119 = vrot.slane %v118, 1
  %v120 = vadd.f32 %v118, %v119
  %v121 = vmax.f32 %v30, %v99
  %v122 = vmax.f32 %v37, %v106
  %v123 = vmax.f32 %v44, %v113
  %v124 = vmax.f32 %v51, %v120
  %v125 = vld [vmem:[%s0 + $0x4] sm:$0xe]
  %v126 = vld [vmem:[%s0 + $0x10] sm:$0xe]
  %v127 = vld [vmem:[%s0 + $0x1c] sm:$0xe]
  %v128 = vld [vmem:[%s0 + $0x28] sm:$0xe]
  %v129 = vunpack.c.l.bf16 %v125
  %v130 = vunpack.c.l.bf16 %v126
  %v131 = vunpack.c.l.bf16 %v127
  %v132 = vunpack.c.l.bf16 %v128
  %v137 = vrot.slane %v129, 2
  %v138 = vrot.slane %v130, 2
  %v139 = vrot.slane %v131, 2
  %v140 = vrot.slane %v132, 2
  %v145 = vsel %vm23, %v137, 0.0
  %v146 = vrot.slane %v145, 4
  %v147 = vadd.f32 %v145, %v146
  %v148 = vrot.slane %v147, 2
  %v149 = vadd.f32 %v147, %v148
  %v150 = vrot.slane %v149, 1
  %v151 = vadd.f32 %v149, %v150
  %v152 = vsel %vm23, %v138, 0.0
  %v153 = vrot.slane %v152, 4
  %v154 = vadd.f32 %v152, %v153
  %v155 = vrot.slane %v154, 2
  %v156 = vadd.f32 %v154, %v155
  %v157 = vrot.slane %v156, 1
  %v158 = vadd.f32 %v156, %v157
  %v159 = vsel %vm23, %v139, 0.0
  %v160 = vrot.slane %v159, 4
  %v161 = vadd.f32 %v159, %v160
  %v162 = vrot.slane %v161, 2
  %v163 = vadd.f32 %v161, %v162
  %v164 = vrot.slane %v163, 1
  %v165 = vadd.f32 %v163, %v164
  %v166 = vsel %vm23, %v140, 0.0
  %v167 = vrot.slane %v166, 4
  %v168 = vadd.f32 %v166, %v167
  %v169 = vrot.slane %v168, 2
  %v170 = vadd.f32 %v168, %v169
  %v171 = vrot.slane %v170, 1
  %v172 = vadd.f32 %v170, %v171
  %v173 = vmax.f32 %v121, %v151
  %v174 = vmax.f32 %v122, %v158
  %v175 = vmax.f32 %v123, %v165
  %v176 = vmax.f32 %v124, %v172
  %v177 = vld [vmem:[%s0 + $0x4] sm:$0x8]
  %v178 = vld [vmem:[%s0 + $0x8] sm:$0x3]
  %v179 = vld [vmem:[%s0 + $0x10] sm:$0x8]
  %v180 = vld [vmem:[%s0 + $0x14] sm:$0x3]
  %v181 = vld [vmem:[%s0 + $0x1c] sm:$0x8]
  %v182 = vld [vmem:[%s0 + $0x20] sm:$0x3]
  %v183 = vld [vmem:[%s0 + $0x28] sm:$0x8]
  %v184 = vld [vmem:[%s0 + $0x2c] sm:$0x3]
  %v185 = vunpack.c.l.bf16 %v177
  %v186 = vunpack.c.l.bf16 %v178
  %v187 = vunpack.c.l.bf16 %v179
  %v188 = vunpack.c.l.bf16 %v180
  %v189 = vunpack.c.l.bf16 %v181
  %v190 = vunpack.c.l.bf16 %v182
  %v191 = vunpack.c.l.bf16 %v183
  %v192 = vunpack.c.l.bf16 %v184
  %vm201 = vcmask 1040384
  %v202 = vrot.slane %v185, 7
  %v203 = vrot.slane %v186, 7
  %v204 = vsel %vm201, %v202, %v203
  %v205 = vrot.slane %v187, 7
  %v206 = vrot.slane %v188, 7
  %v207 = vsel %vm201, %v205, %v206
  %v208 = vrot.slane %v189, 7
  %v209 = vrot.slane %v190, 7
  %v210 = vsel %vm201, %v208, %v209
  %v211 = vrot.slane %v191, 7
  %v212 = vrot.slane %v192, 7
  %v213 = vsel %vm201, %v211, %v212
  %v218 = vsel %vm23, %v204, 0.0
  %v219 = vrot.slane %v218, 4
  %v220 = vadd.f32 %v218, %v219
  %v221 = vrot.slane %v220, 2
  %v222 = vadd.f32 %v220, %v221
  %v223 = vrot.slane %v222, 1
  %v224 = vadd.f32 %v222, %v223
  %v225 = vsel %vm23, %v207, 0.0
  %v226 = vrot.slane %v225, 4
  %v227 = vadd.f32 %v225, %v226
  %v228 = vrot.slane %v227, 2
  %v229 = vadd.f32 %v227, %v228
  %v230 = vrot.slane %v229, 1
  %v231 = vadd.f32 %v229, %v230
  %v232 = vsel %vm23, %v210, 0.0
  %v233 = vrot.slane %v232, 4
  %v234 = vadd.f32 %v232, %v233
  %v235 = vrot.slane %v234, 2
  %v236 = vadd.f32 %v234, %v235
  %v237 = vrot.slane %v236, 1
  %v238 = vadd.f32 %v236, %v237
  %v239 = vsel %vm23, %v213, 0.0
  %v240 = vrot.slane %v239, 4
  %v241 = vadd.f32 %v239, %v240
  %v242 = vrot.slane %v241, 2
  %v243 = vadd.f32 %v241, %v242
  %v244 = vrot.slane %v243, 1
  %v245 = vadd.f32 %v243, %v244
  %v246 = vmax.f32 %v173, %v224
  %v247 = vmax.f32 %v174, %v231
  %v248 = vmax.f32 %v175, %v238
  %v249 = vmax.f32 %v176, %v245
  %v250 = vld [vmem:[%s1] sm:$0x1]
  %v252 = vlaneseq
  %v253 = vshrl.u32 %v252, 7
  %v254 = vsub.s32 0, %v253
  %v255 = vrot.slane %v250, %v254
  %v257 = vmul.f32 %v246, %v255
  %v258 = vmul.f32 %v247, %v255
  %v259 = vmul.f32 %v248, %v255
  %v260 = vmul.f32 %v249, %v255
  %v265 = vrot.slane %v258, 7
  %vm266 = vcmask 1041409
  %v267 = vsel %vm266, %v265, %v257
  %v268 = vrot.slane %v259, 6
  %vm269 = vcmask 1042434
  %v270 = vsel %vm269, %v268, %v267
  %v271 = vrot.slane %v260, 5
  %vm272 = vcmask 1043459
  %v273 = vsel %vm272, %v271, %v270
  %vm275 = vcmask 257024
  %v276 = vsel %vm275, %v273, 0.0
  %277 = vadd.xlane.f32.xlu0 %v276
  %v278 = vpop.xlane.xlu0 %277
  %s279 = sld [smem:[#allocation2]]
  %v280 = vstv %s279
  %v281 = vadd.f32 %v278, %v280
  %vm282 = vcmask 3072
  %283 = vst.msk [vmem:[%s3] sm:$0xf] %vm282, %v281
  // Predicated region
  $region14: #{tpu_custom_call.1} parent=0 // pred_check
    _
  $region15: #{tpu_custom_call.1} parent=0 // pred_check_branch
    %285 = sbr.rel (0) target = $region17
  $region16: #{tpu_custom_call.1} parent=0 // pred_region
    _
  $region17: #{tpu_custom_call.1} parent=0 // pred_fallthru
    _
  // Predicated region
  $region18: #{tpu_custom_call.1} parent=0 // pred_check
    _
  $region19: #{tpu_custom_call.1} parent=0 // pred_check_branch
    %287 = sbr.rel (0) target = $region21
  $region20: #{tpu_custom_call.1} parent=0 // pred_region
    _
  $region21: #{tpu_custom_call.1} parent=0 // pred_fallthru
    _

</llo_original>
